<compile_context>
chip_gen: v7x
topology: tpu7x:2x2x1
jax: 0.10.0
libtpu: 0.0.40
codegen_flags: <defaults>
</compile_context>

<pallas_src>
import jax
import jax.numpy as jnp
from jax import lax
from jax.experimental import pallas as pl
from jax.experimental.pallas import tpu as pltpu


# ---------------------------------------------------------------------------
# Glue: PyTorch-exact bilinear interpolation matrix (align_corners=False).
# ---------------------------------------------------------------------------
def bilinear_matrix(in_size: int, out_size: int) -> jnp.ndarray:
    scale = in_size / out_size
    coord = (jnp.arange(out_size, dtype=jnp.float32) + 0.5) * scale - 0.5
    coord = jnp.maximum(coord, 0.0)                       # PyTorch clamps low side
    idx0 = jnp.floor(coord).astype(jnp.int32)
    idx0 = jnp.minimum(idx0, in_size - 1)
    idx1 = jnp.minimum(idx0 + 1, in_size - 1)
    w_hi = coord - idx0.astype(jnp.float32)
    w_lo = 1.0 - w_hi
    rows = jnp.arange(out_size)
    m = jnp.zeros((out_size, in_size), jnp.float32)
    m = m.at[rows, idx0].add(w_lo)
    m = m.at[rows, idx1].add(w_hi)
    return m


# ---------------------------------------------------------------------------
# Kernel 1: the two poolings, row-tiled over (batch * channel) rows.
#   x_ref  : [TR, HW]   rows = (b, c) pairs, kept in the input dtype
#   pb_ref : [1, HW]    GAP folded through the bilinear resize: vh ⊗ vw
#   out_ref: [TR, 2]    col 0 = uniform GAP mean, col 1 = resized GAP mean
# VPU multiply + XLU lane-reduce only; stays on the HBM roofline.
# ---------------------------------------------------------------------------
def pooling_kernel(x_ref, pb_ref, out_ref):
    hw = x_ref.shape[1]
    xf = x_ref[...].astype(jnp.float32)                       # f32 accumulation
    out_ref[:, 0:1] = jnp.sum(xf, axis=-1, keepdims=True) * (1.0 / hw)
    out_ref[:, 1:2] = jnp.sum(xf * pb_ref[...], axis=-1, keepdims=True)


# ---------------------------------------------------------------------------
# Kernel 2: the three heads as one M=B matmul block (single grid step).
#   p_ref   : [B, 2C]   cols [0:C] = uniform-pooled, [C:2C] = resize-pooled
#   w13_ref : [2C, Kp]  rows [0:C] = w1, [C:2C] = w3
#   bsum_ref: [1, Kp]   b1 + b2b + b3 (pre-summed in the wrapper)
#   out_ref : [B, Kp]   lane-dense (Kp multiple of 128)
# ---------------------------------------------------------------------------
def heads_kernel(p_ref, w13_ref, w2a_ref, w2b_ref, b2a_ref, bsum_ref, out_ref):
    c = w2a_ref.shape[0]
    p = p_ref[...]
    z13 = jnp.dot(p, w13_ref[...], preferred_element_type=jnp.float32)
    hid = jnp.maximum(
        jnp.dot(p[:, :c], w2a_ref[...], preferred_element_type=jnp.float32)
        + b2a_ref[...], 0.0)
    z2 = jnp.dot(hid, w2b_ref[...], preferred_element_type=jnp.float32)
    out_ref[...] = (z13 + z2 + bsum_ref[...]) * (1.0 / 3.0)


# ---------------------------------------------------------------------------
# Wrapper: layout plumbing only (free reshape of x, tiny weight packing).
# ---------------------------------------------------------------------------
def _round_up(n, m):
    return ((n + m - 1) // m) * m


def _choose_row_tile(n_rows, hw, itemsize):
    # ~8 MiB per x buffer (double-buffered -> ~16 MiB) keeps total residency
    # (x buffers + the [1,HW] invariant + outputs) well under every
    # generation's VMEM, including v7x's 64 MiB.
    budget = 8 * 1024 * 1024
    cap = max(8, (budget // max(1, hw * itemsize)) // 8 * 8)
    cap = min(cap, 1024)
    tr = min(cap, _round_up(n_rows, 8))
    if n_rows >= 16:
        # Keep >= 2 grid steps so both TensorCores get work on v7x megacore.
        tr = min(tr, max(8, _round_up((n_rows + 1) // 2, 8)))
    if tr >= n_rows:
        tr = n_rows     # full-extent block (legal even if not a multiple of 8)
    return tr


def ensemble3_hrn(x, params, out_size=(224, 224)):
    B, C, H, W = x.shape
    OH, OW = out_size
    K = params["w1"].shape[1]
    Hd = params["w2a"].shape[1]

    HW = H * W
    R = B * C
    Kp = _round_up(K, 128)
    Hdp = _round_up(Hd, 128)

    # ----- Pooling pass (reads all of x once, in its original dtype) --------
    x_rows = x.reshape(R, HW)                         # free reshape, no pad/cast

    # Fold GAP through the separable bilinear resize:
    #   mean_{oh,ow}(RH @ X @ RW^T) = (1^T RH / OH) @ X @ (RW^T 1 / OW)
    rh = bilinear_matrix(H, OH)                       # [OH, H]
    rw = bilinear_matrix(W, OW)                       # [OW, W]
    vh = jnp.sum(rh, axis=0) / float(OH)              # [H]
    vw = jnp.sum(rw, axis=0) / float(OW)              # [W]
    pool_b = (vh[:, None] * vw[None, :]).reshape(1, HW).astype(jnp.float32)

    itemsize = x.dtype.itemsize
    TR = _choose_row_tile(R, HW, itemsize)
    grid_r = pl.cdiv(R, TR)

    pooled = pl.pallas_call(
        pooling_kernel,
        out_shape=jax.ShapeDtypeStruct((R, 2), jnp.float32),
        grid=(grid_r,),
        in_specs=[
            pl.BlockSpec((TR, HW), lambda r: (r, 0)),   # big, pipelined operand
            pl.BlockSpec((1, HW), lambda r: (0, 0)),    # grid-invariant weights
        ],
        out_specs=pl.BlockSpec((TR, 2), lambda r: (r, 0)),
        compiler_params=pltpu.CompilerParams(
            dimension_semantics=("parallel",),
            vmem_limit_bytes=48 * 1024 * 1024),
        cost_estimate=pl.CostEstimate(
            flops=3 * R * HW,
            transcendentals=0,
            bytes_accessed=R * HW * itemsize + HW * 4 + R * 2 * 4),
    )(x_rows, pool_b)

    pooled_u = pooled[:, 0].reshape(B, C)              # uniform GAP means
    pooled_r = pooled[:, 1].reshape(B, C)              # resized GAP means
    pooled_ub = jnp.concatenate([pooled_u, pooled_r], axis=1)   # [B, 2C]

    # ----- Head pass (tiny, one well-shaped M=B matmul block) ---------------
    def pad_cols(a, n):
        return jnp.pad(a.astype(jnp.float32), ((0, 0), (0, n - a.shape[1])))

    w13 = jnp.concatenate([pad_cols(params["w1"], Kp),
                           pad_cols(params["w3"], Kp)], axis=0)        # [2C, Kp]
    w2a = pad_cols(params["w2a"], Hdp)                                 # [C, Hdp]
    w2b = jnp.pad(params["w2b"].astype(jnp.float32),
                  ((0, Hdp - Hd), (0, Kp - K)))                        # [Hdp, Kp]
    b2a = pad_cols(params["b2a"], Hdp)                                 # [1, Hdp]
    bias_sum = pad_cols(params["b1"] + params["b2b"] + params["b3"], Kp)

    out = pl.pallas_call(
        heads_kernel,
        out_shape=jax.ShapeDtypeStruct((B, Kp), jnp.float32),
        grid=(1,),
        in_specs=[
            pl.BlockSpec((B, 2 * C), lambda i: (0, 0)),
            pl.BlockSpec((2 * C, Kp), lambda i: (0, 0)),
            pl.BlockSpec((C, Hdp), lambda i: (0, 0)),
            pl.BlockSpec((Hdp, Kp), lambda i: (0, 0)),
            pl.BlockSpec((1, Hdp), lambda i: (0, 0)),
            pl.BlockSpec((1, Kp), lambda i: (0, 0)),
        ],
        out_specs=pl.BlockSpec((B, Kp), lambda i: (0, 0)),
        compiler_params=pltpu.CompilerParams(
            dimension_semantics=("arbitrary",)),
    )(pooled_ub, w13, w2a, w2b, b2a, bias_sum)

    return out[:, :K]


# ---------------------------------------------------------------------------
# Pure-JAX reference (same synthetic sub-models), f32-exact matmuls.
# ---------------------------------------------------------------------------
def ensemble3_hrn_ref(x, params, out_size=(224, 224)):
    PH = lax.Precision.HIGHEST
    B, C, H, W = x.shape
    OH, OW = out_size
    xf = x.astype(jnp.float32)
    pooled = jnp.mean(xf, axis=(2, 3))                              # [B, C]
    logits1 = jnp.dot(pooled, params["w1"], precision=PH) + params["b1"]
    hid = jnp.maximum(jnp.dot(pooled, params["w2a"], precision=PH)
                      + params["b2a"], 0.0)
    logits2 = jnp.dot(hid, params["w2b"], precision=PH) + params["b2b"]
    rh = bilinear_matrix(H, OH)
    rw = bilinear_matrix(W, OW)
    x1 = jnp.einsum("oh,bchw,pw->bcop", rh, xf, rw, precision=PH)   # explicit resize
    pooled3 = jnp.mean(x1, axis=(2, 3))
    logits3 = jnp.dot(pooled3, params["w3"], precision=PH) + params["b3"]
    return (logits1 + logits2 + logits3) / 3.0


if __name__ == "__main__":
    B, C, H, W = 2, 4, 16, 16
    K, Hd = 10, 16

    key = jax.random.PRNGKey(0)
    kx, k1, kb1, k2a, kb2a, k2b, kb2b, k3, kb3 = jax.random.split(key, 9)

    x = jax.random.normal(kx, (B, C, H, W), jnp.float32)
    params = {
        "w1":  0.2 * jax.random.normal(k1,  (C, K),  jnp.float32),
        "b1":  0.1 * jax.random.normal(kb1, (1, K),  jnp.float32),
        "w2a": 0.2 * jax.random.normal(k2a, (C, Hd), jnp.float32),
        "b2a": 0.1 * jax.random.normal(kb2a, (1, Hd), jnp.float32),
        "w2b": 0.2 * jax.random.normal(k2b, (Hd, K), jnp.float32),
        "b2b": 0.1 * jax.random.normal(kb2b, (1, K),  jnp.float32),
        "w3":  0.2 * jax.random.normal(k3,  (C, K),  jnp.float32),
        "b3":  0.1 * jax.random.normal(kb3, (1, K),  jnp.float32),
    }

    out = jax.block_until_ready(ensemble3_hrn(x, params))
    ref = ensemble3_hrn_ref(x, params)

    assert out.shape == (B, K), out.shape
    err = float(jnp.max(jnp.abs(out - ref)))
    assert jnp.allclose(out, ref, atol=1e-4, rtol=1e-4), "max abs err = %g" % err

    print("KERNEL_OK")
</pallas_src>

<mosaic_0001>
module attributes {stable_mosaic.version = 11 : i64} {
  func.func @pooling_kernel(%arg0: i32, %arg1: memref<8x256xf32, #tpu.memory_space<vmem>>, %arg2: memref<1x256xf32, #tpu.memory_space<vmem>>, %arg3: memref<8x2xf32, #tpu.memory_space<vmem>>) attributes {dimension_semantics = [#tpu.dimension_semantics<parallel>], iteration_bounds = array<i64: 1>, scalar_prefetch = 0 : i64, scratch_operands = 0 : i64, tpu.core_type = #tpu.core_type<tc>, window_params = [{transform_indices = @transform_0, window_bounds = array<i64: 8, 256>}, {pipeline_mode = #tpu.pipeline_mode<synchronous>, transform_indices = @transform_1, window_bounds = array<i64: 1, 256>}, {transform_indices = @transform_2, window_bounds = array<i64: 8, 2>}]} {
    %c0 = arith.constant 0 : index
    %c0_0 = arith.constant 0 : index
    %0 = vector.load %arg1[%c0, %c0_0] : memref<8x256xf32, #tpu.memory_space<vmem>>, vector<8x256xf32>
    %cst = arith.constant dense<0.000000e+00> : vector<8xf32>
    %1 = vector.multi_reduction <add>, %0, %cst [1] : vector<8x256xf32> to vector<8xf32>
    %2 = vector.shape_cast %1 : vector<8xf32> to vector<8x1xf32>
    %cst_1 = arith.constant 3.906250e-03 : f32
    %3 = vector.broadcast %cst_1 : f32 to vector<8x1xf32>
    %4 = arith.mulf %2, %3 : vector<8x1xf32>
    %c0_2 = arith.constant 0 : index
    %c0_3 = arith.constant 0 : index
    %5 = vector.load %arg3[%c0_2, %c0_3] : memref<8x2xf32, #tpu.memory_space<vmem>>, vector<8x1xf32>
    tpu.vector_store %arg3[%c0_2, %c0_3], %4 {strides = array<i32>} : memref<8x2xf32, #tpu.memory_space<vmem>>, vector<8x1xf32>,
    %c0_4 = arith.constant 0 : index
    %c0_5 = arith.constant 0 : index
    %6 = vector.load %arg2[%c0_4, %c0_5] : memref<1x256xf32, #tpu.memory_space<vmem>>, vector<1x256xf32>
    %7 = vector.broadcast %6 : vector<1x256xf32> to vector<8x256xf32>
    %8 = arith.mulf %0, %7 : vector<8x256xf32>
    %cst_6 = arith.constant dense<0.000000e+00> : vector<8xf32>
    %9 = vector.multi_reduction <add>, %8, %cst_6 [1] : vector<8x256xf32> to vector<8xf32>
    %10 = vector.shape_cast %9 : vector<8xf32> to vector<8x1xf32>
    %c0_7 = arith.constant 0 : index
    %c1 = arith.constant 1 : index
    %11 = vector.load %arg3[%c0_7, %c1] : memref<8x2xf32, #tpu.memory_space<vmem>>, vector<8x1xf32>
    tpu.vector_store %arg3[%c0_7, %c1], %10 {strides = array<i32>} : memref<8x2xf32, #tpu.memory_space<vmem>>, vector<8x1xf32>,
    return
  }
  func.func @transform_0(%arg0: i32) -> (i32, i32) {
    %c0_i32 = arith.constant 0 : i32
    %c0_i32_0 = arith.constant 0 : i32
    return %arg0, %c0_i32 : i32, i32
  }
  func.func @transform_1(%arg0: i32) -> (i32, i32) {
    %c0_i32 = arith.constant 0 : i32
    %c0_i32_0 = arith.constant 0 : i32
    %c0_i32_1 = arith.constant 0 : i32
    return %c0_i32, %c0_i32_0 : i32, i32
  }
  func.func @transform_2(%arg0: i32) -> (i32, i32) {
    %c0_i32 = arith.constant 0 : i32
    %c0_i32_0 = arith.constant 0 : i32
    return %arg0, %c0_i32 : i32, i32
  }
}

</mosaic_0001>

<llo_original>
// kernel: tpu_custom_call.1
$region0: #{tpu_custom_call.1}
  #allocation0 [shape = 'u32[]', space=smem, size = 0x4, offset = 0x4, fixed_abs, tag = 'smem constant byte address 0x4 - core index']
  #allocation1 [shape = 'u32[144,128]{1,0:T(1,128)}', space=vmem, size = 0x12000, scoped, tag = 'internal scratch']
  %s0 = inlined_call_operand.hbm [shape: f32[8,256], index: 0, kind: input, shape index: {}]
  %s1 = inlined_call_operand.vmem [shape: f32[1,256], index: 1, kind: input, shape index: {}]
  %s2 = inlined_call_operand.vmem [shape: f32[8,2], index: 2, kind: output, shape index: {}]
  %s3 = sld [smem:[#allocation0]]
  $region22: #{tpu_custom_call.1} parent=0
    _
  %s5 = ssub.s32 1, %s3
  %s6 = scalar_select 0, %s5, %s3
  $region1: #{tpu_custom_call.1} parent=0
    #allocation2 [shape = 'u8[8192]{0}', space=vmem, size = 0x2000, scoped, tag = 'input window, operand 0, single buffered']
    #allocation3 [shape = 's32[1]{0}', space=sflag, size = 0x4, scoped, tag = 'scoped memory for tpu_custom_call.1']
    %7 = vsyncpa [#allocation3], 0
    // Predicated region
    $region2: #{tpu_custom_call.1} parent=1 // pred_check
      _
    $region3: #{tpu_custom_call.1} parent=1 // pred_check_branch
      %9 = sbr.rel (0) target = $region5
    $region4: #{tpu_custom_call.1} parent=1 // pred_region
      %s11 = ssub.s32 256, 256
      %12 = vsyncadd [#allocation3], %s11
      %s14 = sshll.u32 [#allocation2], 4
      %s15 = int_to_ptr.vmem [resolvable:$true] %s14
      %17 = dma.hbm_to_vmem [thread:$0]  %s0, 256, %s15, [#allocation3]
    $region5: #{tpu_custom_call.1} parent=1 // pred_fallthru
      _
    // Predicated region
    $region6: #{tpu_custom_call.1} parent=1 // pred_check
      _
    $region7: #{tpu_custom_call.1} parent=1 // pred_check_branch
      %19 = sbr.rel (0) target = $region9
    $region8: #{tpu_custom_call.1} parent=1 // pred_region
      _
    $region9: #{tpu_custom_call.1} parent=1 // pred_fallthru
      _
    // Predicated region
    $region10: #{tpu_custom_call.1} parent=1 // pred_check
      _
    $region11: #{tpu_custom_call.1} parent=1 // pred_check_branch
      %21 = sbr.rel (0) target = $region13
    $region12: #{tpu_custom_call.1} parent=1 // pred_region
      %22 = dma.done [#allocation3], 256
    $region13: #{tpu_custom_call.1} parent=1 // pred_fallthru
      _
    %v23 = vld [vmem:[#allocation2] sm:$0xff]
    %v24 = vld [vmem:[#allocation2 + $0x8] sm:$0xff]
    %v25 = vadd.f32 %v23, %v24
    %26 = vadd.xlane.f32.xlu0 %v25
    %v27 = vpop.xlane.xlu0 %26
    %v28 = vmul.f32 %v27, 0.00390625
    %vm29 = vcmask 7168
    %30 = vst.msk [vmem:[%s2] sm:$0xff] %vm29, %v28
    %v31 = vld [vmem:[%s1] sm:$0x3]
    %v33 = vlaneseq
    %v34 = vshrl.u32 %v33, 7
    %v35 = vsub.s32 0, %v34
    %v36 = vrot.slane %v31, %v35
    %v37 = vlaneseq
    %v38 = vshrl.u32 %v37, 7
    %v39 = vsub.s32 1, %v38
    %v40 = vrot.slane %v31, %v39
    %v43 = vmul.f32 %v23, %v36
    %v44 = vmul.f32 %v24, %v40
    %v45 = vadd.f32 %v43, %v44
    %46 = vadd.xlane.f32.xlu0 %v45
    %v47 = vpop.xlane.xlu0 %46
    %vm48 = vcmask 15368
    %49 = vst.msk [vmem:[%s2] sm:$0xff] %vm48, %v47
    // Predicated region
    $region14: #{tpu_custom_call.1} parent=1 // pred_check
      _
    $region15: #{tpu_custom_call.1} parent=1 // pred_check_branch
      %51 = sbr.rel (0) target = $region17
    $region16: #{tpu_custom_call.1} parent=1 // pred_region
      _
    $region17: #{tpu_custom_call.1} parent=1 // pred_fallthru
      _
    // Predicated region
    $region18: #{tpu_custom_call.1} parent=1 // pred_check
      _
    $region19: #{tpu_custom_call.1} parent=1 // pred_check_branch
      %53 = sbr.rel (0) target = $region21
    $region20: #{tpu_custom_call.1} parent=1 // pred_region
      _
    $region21: #{tpu_custom_call.1} parent=1 // pred_fallthru
      _
    %54 = vsyncpa [#allocation3], 1

</llo_original>
